<compile_context>
chip_gen: v5e
topology: v5e:2x2
jax: 0.10.0
libtpu: 0.0.40
codegen_flags: <defaults>
</compile_context>

<pallas_src>
import jax
import jax.numpy as jnp
from jax.experimental import pallas as pl
from jax.experimental.pallas import tpu as pltpu

IN_FEATURES = 2
OUT_FEATURES = 1
LANE = 128                      # lane width (last dim of every block)
SUBLANE = 8                     # sublane quantum
MIN_BLOCK_ELEMS = LANE * SUBLANE        # 1024: smallest dense (8,128) slab
MAX_BLOCK_ELEMS = 256 * 1024            # per grid step per feature (1 MiB f32)


def _round_up(x, m):
    return ((x + m - 1) // m) * m


def _linear_kernel(params_ref, x_ref, o_ref):
    # params_ref: (3,)                f32 in SMEM -> [w0, w1, b]
    # x_ref:      (2, rows_blk, 128)  f32 in VMEM (feature planes, dense slabs)
    # o_ref:      (rows_blk, 128)     f32 in VMEM (dense output slab)
    w0 = params_ref[0]
    w1 = params_ref[1]
    b = params_ref[2]
    o_ref[...] = x_ref[0, :, :] * w0 + x_ref[1, :, :] * w1 + b


def linear_forward(x, weight, bias, *, max_block_elems=MAX_BLOCK_ELEMS):
    """Pallas equivalent of nn.Linear(2, 1)(x).

    x:      (N, 2)  float32
    weight: (1, 2)  float32  (PyTorch layout: (out_features, in_features))
    bias:   (1,)    float32
    returns (N, 1)  float32
    """
    n, k = x.shape
    assert k == IN_FEATURES

    # Adaptive batch tiling: ~max_block_elems elements per grid step, padded up
    # to a multiple of the (8,128) slab so every block is fully dense.
    num_blocks = max(1, pl.cdiv(n, max_block_elems))
    n_block = _round_up(pl.cdiv(n, num_blocks), MIN_BLOCK_ELEMS)
    n_pad = n_block * num_blocks
    rows = n_pad // LANE
    rows_blk = n_block // LANE

    # Transposed, zero-padded feature planes viewed as (2, rows, 128):
    # lane- and sublane-dense for both the DMA and the VPU.
    x_t = jnp.zeros((IN_FEATURES, n_pad), jnp.float32)
    x_t = x_t.at[:, :n].set(x.T.astype(jnp.float32))
    x_t = x_t.reshape(IN_FEATURES, rows, LANE)

    # 12 bytes of parameters, kept in SMEM as scalars.
    params = jnp.concatenate(
        [weight.reshape(-1), bias.reshape(-1)]).astype(jnp.float32)  # (3,)

    out_p = pl.pallas_call(
        _linear_kernel,
        out_shape=jax.ShapeDtypeStruct((rows, LANE), jnp.float32),
        grid_spec=pltpu.PrefetchScalarGridSpec(
            num_scalar_prefetch=0,
            grid=(num_blocks,),
            in_specs=[
                pl.BlockSpec(memory_space=pltpu.MemorySpace.SMEM),  # params
                pl.BlockSpec((IN_FEATURES, rows_blk, LANE),
                             lambda i: (0, i, 0)),                  # x planes
            ],
            out_specs=pl.BlockSpec((rows_blk, LANE), lambda i: (i, 0)),
        ),
        compiler_params=pltpu.CompilerParams(
            dimension_semantics=("parallel",)),
    )(params, x_t)

    # (rows,128) row-major == flat (n_pad,): reshape is free.
    return out_p.reshape(n_pad)[:n].reshape(n, OUT_FEATURES)


if __name__ == "__main__":
    key = jax.random.PRNGKey(0)
    kx, kw, kx2, kx3 = jax.random.split(key, 4)

    # Deterministic parameter init matching the module's __init__:
    #   weight ~ Normal(0, 0.01), bias = 0
    weight = 0.01 * jax.random.normal(kw, (OUT_FEATURES, IN_FEATURES), jnp.float32)
    bias = jnp.zeros((OUT_FEATURES,), jnp.float32)

    fwd = jax.jit(linear_forward, static_argnames=("max_block_elems",))

    # Small example input: batch=8, features=2 (single grid step).
    x = jax.random.normal(kx, (8, IN_FEATURES), jnp.float32)
    out = jax.block_until_ready(fwd(x, weight, bias))
    ref = x @ weight.T + bias
    assert out.shape == (8, 1)
    assert jnp.allclose(out, ref, atol=1e-5), "mismatch vs reference (batch=8)"

    # Batch=1000 exercises padding within a single block.
    x_big = jax.random.normal(kx2, (1000, IN_FEATURES), jnp.float32)
    out_big = jax.block_until_ready(fwd(x_big, weight, bias))
    ref_big = x_big @ weight.T + bias
    assert out_big.shape == (1000, 1)
    assert jnp.allclose(out_big, ref_big, atol=1e-5), "mismatch vs reference (batch=1000)"

    # Small max_block_elems forces the multi-block (tiled grid) path cheaply.
    x_multi = jax.random.normal(kx3, (2500, IN_FEATURES), jnp.float32)
    out_multi = jax.block_until_ready(
        fwd(x_multi, weight, bias, max_block_elems=MIN_BLOCK_ELEMS))
    ref_multi = x_multi @ weight.T + bias
    assert out_multi.shape == (2500, 1)
    assert jnp.allclose(out_multi, ref_multi, atol=1e-5), \
        "mismatch vs reference (batch=2500, tiled grid)"

    print("KERNEL_OK")
</pallas_src>

<mosaic_0001>
module attributes {stable_mosaic.version = 11 : i64} {
  func.func @_linear_kernel(%arg0: i32, %arg1: memref<3xf32, #tpu.memory_space<smem>>, %arg2: memref<2x8x128xf32, #tpu.memory_space<vmem>>, %arg3: memref<8x128xf32, #tpu.memory_space<vmem>>) attributes {dimension_semantics = [#tpu.dimension_semantics<parallel>], iteration_bounds = array<i64: 1>, scalar_prefetch = 0 : i64, scratch_operands = 0 : i64, tpu.core_type = #tpu.core_type<tc>, window_params = [{transform_indices = @transform_0, window_bounds = array<i64: 3>}, {transform_indices = @transform_1, window_bounds = array<i64: 2, 8, 128>}, {transform_indices = @transform_2, window_bounds = array<i64: 8, 128>}]} {
    %c0 = arith.constant 0 : index
    %0 = memref.load %arg1[%c0] : memref<3xf32, #tpu.memory_space<smem>>
    %c1 = arith.constant 1 : index
    %1 = memref.load %arg1[%c1] : memref<3xf32, #tpu.memory_space<smem>>
    %c2 = arith.constant 2 : index
    %2 = memref.load %arg1[%c2] : memref<3xf32, #tpu.memory_space<smem>>
    %c0_0 = arith.constant 0 : index
    %c0_1 = arith.constant 0 : index
    %c0_2 = arith.constant 0 : index
    %3 = vector.load %arg2[%c0_0, %c0_1, %c0_2] : memref<2x8x128xf32, #tpu.memory_space<vmem>>, vector<1x8x128xf32>
    %4 = vector.shape_cast %3 : vector<1x8x128xf32> to vector<8x128xf32>
    %5 = vector.broadcast %0 : f32 to vector<8x128xf32>
    %6 = arith.mulf %4, %5 : vector<8x128xf32>
    %c1_3 = arith.constant 1 : index
    %c0_4 = arith.constant 0 : index
    %c0_5 = arith.constant 0 : index
    %7 = vector.load %arg2[%c1_3, %c0_4, %c0_5] : memref<2x8x128xf32, #tpu.memory_space<vmem>>, vector<1x8x128xf32>
    %8 = vector.shape_cast %7 : vector<1x8x128xf32> to vector<8x128xf32>
    %9 = vector.broadcast %1 : f32 to vector<8x128xf32>
    %10 = arith.mulf %8, %9 : vector<8x128xf32>
    %11 = arith.addf %6, %10 : vector<8x128xf32>
    %12 = vector.broadcast %2 : f32 to vector<8x128xf32>
    %13 = arith.addf %11, %12 : vector<8x128xf32>
    %c0_6 = arith.constant 0 : index
    %c0_7 = arith.constant 0 : index
    %14 = vector.load %arg3[%c0_6, %c0_7] : memref<8x128xf32, #tpu.memory_space<vmem>>, vector<8x128xf32>
    tpu.vector_store %arg3[%c0_6, %c0_7], %13 {strides = array<i32>} : memref<8x128xf32, #tpu.memory_space<vmem>>, vector<8x128xf32>,
    return
  }
  func.func @transform_0(%arg0: i32) -> i32 {
    %c0_i32 = arith.constant 0 : i32
    %c0_i32_0 = arith.constant 0 : i32
    return %c0_i32 : i32
  }
  func.func @transform_1(%arg0: i32) -> (i32, i32, i32) {
    %c0_i32 = arith.constant 0 : i32
    %c0_i32_0 = arith.constant 0 : i32
    %c0_i32_1 = arith.constant 0 : i32
    return %c0_i32, %arg0, %c0_i32_0 : i32, i32, i32
  }
  func.func @transform_2(%arg0: i32) -> (i32, i32) {
    %c0_i32 = arith.constant 0 : i32
    %c0_i32_0 = arith.constant 0 : i32
    return %arg0, %c0_i32 : i32, i32
  }
}

</mosaic_0001>

<llo_original>
// kernel: linear_forward.1
$region0: #{linear_forward.1}
  #allocation0 [shape = 'u32[]', space=smem, size = 0x4, offset = 0x4, fixed_abs, tag = 'smem constant byte address 0x4 - core index']
  #allocation1 [shape = 'u32[72,128]{1,0:T(1,128)}', space=vmem, size = 0x9000, scoped, tag = 'internal scratch']
  %s0 = inlined_call_operand.vmem [shape: f32[3], index: 0, kind: input, shape index: {}]
  %s1 = inlined_call_operand.vmem [shape: f32[2,8,128], index: 1, kind: input, shape index: {}]
  %s2 = inlined_call_operand.vmem [shape: f32[8,128], index: 2, kind: output, shape index: {}]
  %s3 = sld [smem:[#allocation0]]
  $region22: #{linear_forward.1} parent=0
    _
  %s5 = ssub.s32 1, %s3
  %s6 = scalar_select 0, %s5, %s3
  $region1: #{linear_forward.1} parent=0
    #allocation2 [shape = 'u8[512]{0}', space=smem, size = 0x200, scoped, tag = 'input window, operand 0, single buffered']
    #allocation3 [shape = 's32[1]{0}', space=sflag, size = 0x4, scoped, tag = 'scoped memory for linear_forward.1']
    %7 = vsyncpa [#allocation3], 0
    // Predicated region
    $region2: #{linear_forward.1} parent=1 // pred_check
      _
    $region3: #{linear_forward.1} parent=1 // pred_check_branch
      %9 = sbr.rel (0) target = $region5
    $region4: #{linear_forward.1} parent=1 // pred_region
      %11 = vsyncadd [#allocation3], 0
      %s13 = sshll.u32 %s0, 4
      %s14 = int_to_ptr.vmem [resolvable:$true] %s13
      %16 = dma.vmem_to_smem %s14, 16, [#allocation2], [#allocation3]
    $region5: #{linear_forward.1} parent=1 // pred_fallthru
      _
    // Predicated region
    $region6: #{linear_forward.1} parent=1 // pred_check
      _
    $region7: #{linear_forward.1} parent=1 // pred_check_branch
      %18 = sbr.rel (0) target = $region9
    $region8: #{linear_forward.1} parent=1 // pred_region
      _
    $region9: #{linear_forward.1} parent=1 // pred_fallthru
      _
    // Predicated region
    $region10: #{linear_forward.1} parent=1 // pred_check
      _
    $region11: #{linear_forward.1} parent=1 // pred_check_branch
      %20 = sbr.rel (0) target = $region13
    $region12: #{linear_forward.1} parent=1 // pred_region
      %22 = dma.done [#allocation3], 16
    $region13: #{linear_forward.1} parent=1 // pred_fallthru
      _
    %23 = sfence
    %s24 = sld [smem:[#allocation2]]
    %s25 = sld [smem:[#allocation2 + $0x1]]
    %s26 = sld [smem:[#allocation2 + $0x2]]
    %v27 = vld [vmem:[%s1] sm:$0xff]
    %v28 = vstv %s24
    %v29 = vmul.f32 %v27, %v28
    %s30 = scalar_lea.vmem %s1, 8
    %v31 = vld [vmem:[%s30] sm:$0xff]
    %v32 = vstv %s25
    %v33 = vmul.f32 %v31, %v32
    %v34 = vadd.f32 %v29, %v33
    %v35 = vstv %s26
    %v36 = vadd.f32 %v34, %v35
    %37 = vst [vmem:[%s2] sm:$0xff] %v36
    // Predicated region
    $region14: #{linear_forward.1} parent=1 // pred_check
      _
    $region15: #{linear_forward.1} parent=1 // pred_check_branch
      %39 = sbr.rel (0) target = $region17
    $region16: #{linear_forward.1} parent=1 // pred_region
      _
    $region17: #{linear_forward.1} parent=1 // pred_fallthru
      _
    // Predicated region
    $region18: #{linear_forward.1} parent=1 // pred_check
      _
    $region19: #{linear_forward.1} parent=1 // pred_check_branch
      %41 = sbr.rel (0) target = $region21
    $region20: #{linear_forward.1} parent=1 // pred_region
      _
    $region21: #{linear_forward.1} parent=1 // pred_fallthru
      _
    %42 = vsyncpa [#allocation3], 1

</llo_original>
